<compile_context>
chip_gen: v5e
topology: v5e:2x2
jax: 0.10.0
libtpu: 0.0.40
codegen_flags: <defaults>
</compile_context>

<pallas_src>
import functools

import jax
import jax.numpy as jnp
from jax.experimental import pallas as pl
from jax.experimental.pallas import tpu as pltpu


def nn3l_kernel(x_ref, w1_ref, b1_ref, w2_ref, b2_ref, out_ref):
    # Layer 1: Linear(D_in -> H) + Tanh.  MXU matmul with f32 accumulation,
    # bias add on the VPU, tanh on the EUP (all f32 -> safe on v5e too).
    h = jnp.dot(x_ref[...], w1_ref[...], preferred_element_type=jnp.float32)
    h = jnp.tanh(h + b1_ref[...])            # b1 is (1, H): broadcasts over rows
    # Layer 2: Linear(H -> D_out).
    y = jnp.dot(h.astype(w2_ref.dtype), w2_ref[...],
                preferred_element_type=jnp.float32)
    out_ref[...] = (y + b2_ref[...]).astype(out_ref.dtype)


def _round_up(n, m):
    return ((n + m - 1) // m) * m


def _choose_batch_tiling(batch, max_tm=256):
    """Pick (tile_m, padded_batch) = fewest, largest batch tiles.

    * minimize grid steps (per-step overhead dominates at these sizes),
    * keep the tile count even when >1 so v7x's two TensorCores both get work,
    * cap tm at 256 so the (tm, H) f32 hidden activation does not overflow the
      64 x 4 KiB vreg file even for H up to 128.
    """
    b8 = _round_up(max(batch, 1), 8)
    n_tiles = max(1, -(-b8 // max_tm))
    if n_tiles > 1 and n_tiles % 2 == 1:
        n_tiles += 1
    tm = _round_up(-(-b8 // n_tiles), 8)
    return tm, tm * n_tiles


@functools.partial(jax.jit, static_argnames=("tm",))
def _nn3l_pallas(x_padded, w1, b1, w2, b2, *, tm):
    B_p, D_in = x_padded.shape
    H, D_out = w2.shape
    n_tiles = B_p // tm

    # Advisory cost hint for XLA's scheduler around the custom call.
    flops = 2 * B_p * (D_in * H + H * D_out)
    bytes_accessed = 4 * (B_p * D_in + D_in * H + H + H * D_out + D_out + B_p * D_out)
    cost = pl.CostEstimate(flops=flops, transcendentals=B_p * H,
                           bytes_accessed=bytes_accessed)

    # VMEM budget from the actual footprint: double-buffered x/out tiles,
    # (double-buffered) resident weights, hidden activation.  No 16 MiB floor;
    # a few MiB of headroom, capped well under v7x's 64 MiB per-TC VMEM.
    tile_bytes = 2 * tm * (D_in + D_out) * 4
    weight_bytes = 2 * (D_in * H + H + H * D_out + D_out) * 4
    hidden_bytes = tm * H * 4
    vmem_limit = min(int(1.5 * (tile_bytes + weight_bytes + hidden_bytes)) + (4 << 20),
                     48 << 20)

    return pl.pallas_call(
        nn3l_kernel,
        out_shape=jax.ShapeDtypeStruct((B_p, D_out), x_padded.dtype),
        grid_spec=pltpu.PrefetchScalarGridSpec(
            num_scalar_prefetch=0,
            grid=(n_tiles,),
            in_specs=[
                # x: streamed per batch tile; last dim = full D_in (no lane pad).
                pl.BlockSpec((tm, D_in), lambda i: (i, 0)),
                # Weights/biases: same block for every i -> DMA'd once, resident
                # in VMEM across the whole grid.  (pipeline_mode=pl.Buffered(1)
                # is the lever if these grow large enough to pressure VMEM.)
                pl.BlockSpec((D_in, H), lambda i: (0, 0)),
                pl.BlockSpec((1, H), lambda i: (0, 0)),
                pl.BlockSpec((H, D_out), lambda i: (0, 0)),
                pl.BlockSpec((1, D_out), lambda i: (0, 0)),
            ],
            # Full (un-padded) D_out output block: 8x fewer HBM bytes written
            # than lane-padding to 128; masked stores are cheaper at 16 lanes.
            out_specs=pl.BlockSpec((tm, D_out), lambda i: (i, 0)),
        ),
        compiler_params=pltpu.CompilerParams(
            dimension_semantics=("parallel",),   # batch tiles shard across TCs on v7x
            vmem_limit_bytes=vmem_limit,
        ),
        cost_estimate=cost,
    )(x_padded, w1, b1, w2, b2)


def nn3l_forward(x, w1, b1, w2, b2):
    """NN_3L.forward: tanh(x @ W1 + b1) @ W2 + b2.

    No per-call feature padding; the only wrapper copy is a batch-row pad of x
    when B is not a multiple of the chosen batch tile.
    """
    B = x.shape[0]
    b1 = b1.reshape(1, -1)
    b2 = b2.reshape(1, -1)
    tm, B_p = _choose_batch_tiling(B)
    x_padded = jnp.pad(x, ((0, B_p - B), (0, 0))) if B_p != B else x
    out = _nn3l_pallas(x_padded, w1, b1, w2, b2, tm=tm)
    return out[:B] if B_p != B else out


def init_params(key, input_dim, hidden_dim, output_dim):
    # Deterministic init mimicking PyTorch's default: U(-1/sqrt(fan_in), +).
    k1, k2, k3, k4 = jax.random.split(key, 4)
    bound1 = 1.0 / jnp.sqrt(input_dim)
    bound2 = 1.0 / jnp.sqrt(hidden_dim)
    # Stored transposed vs. PyTorch (out,in) -> (in,out) so the kernel does x @ W.
    w1 = jax.random.uniform(k1, (input_dim, hidden_dim), jnp.float32, -bound1, bound1)
    b1 = jax.random.uniform(k2, (hidden_dim,), jnp.float32, -bound1, bound1)
    w2 = jax.random.uniform(k3, (hidden_dim, output_dim), jnp.float32, -bound2, bound2)
    b2 = jax.random.uniform(k4, (output_dim,), jnp.float32, -bound2, bound2)
    return w1, b1, w2, b2


if __name__ == "__main__":
    key = jax.random.PRNGKey(0)
    kx, kp = jax.random.split(key)

    # Toy module dims matching NN_3L; batch large enough to exercise the
    # two-tile grid (tm=256, grid=(2,)).
    batch = 512
    input_dim = 32
    hidden_dim = 32
    output_dim = 16

    x = jax.random.normal(kx, (batch, input_dim), jnp.float32)
    w1, b1, w2, b2 = init_params(kp, input_dim, hidden_dim, output_dim)

    out = jax.block_until_ready(nn3l_forward(x, w1, b1, w2, b2))

    # Pure-JAX reference check of the forward semantics.
    ref = jnp.tanh(x @ w1 + b1) @ w2 + b2
    assert out.shape == (batch, output_dim)
    assert jnp.allclose(out, ref, atol=1e-5, rtol=1e-5)

    # Ragged batch exercises the row-pad path (single 8-row tile).
    out_small = jax.block_until_ready(nn3l_forward(x[:7], w1, b1, w2, b2))
    assert out_small.shape == (7, output_dim)
    assert jnp.allclose(out_small, ref[:7], atol=1e-5, rtol=1e-5)

    print("KERNEL_OK")
</pallas_src>

<mosaic_0001>
module attributes {stable_mosaic.version = 11 : i64} {
  func.func @nn3l_kernel(%arg0: i32, %arg1: memref<256x32xf32, #tpu.memory_space<vmem>>, %arg2: memref<32x32xf32, #tpu.memory_space<vmem>>, %arg3: memref<1x32xf32, #tpu.memory_space<vmem>>, %arg4: memref<32x16xf32, #tpu.memory_space<vmem>>, %arg5: memref<1x16xf32, #tpu.memory_space<vmem>>, %arg6: memref<256x16xf32, #tpu.memory_space<vmem>>) attributes {dimension_semantics = [#tpu.dimension_semantics<parallel>], iteration_bounds = array<i64: 2>, scalar_prefetch = 0 : i64, scratch_operands = 0 : i64, tpu.core_type = #tpu.core_type<tc>, window_params = [{transform_indices = @transform_0, window_bounds = array<i64: 256, 32>}, {pipeline_mode = #tpu.pipeline_mode<synchronous>, transform_indices = @transform_1, window_bounds = array<i64: 32, 32>}, {pipeline_mode = #tpu.pipeline_mode<synchronous>, transform_indices = @transform_2, window_bounds = array<i64: 1, 32>}, {pipeline_mode = #tpu.pipeline_mode<synchronous>, transform_indices = @transform_3, window_bounds = array<i64: 32, 16>}, {pipeline_mode = #tpu.pipeline_mode<synchronous>, transform_indices = @transform_4, window_bounds = array<i64: 1, 16>}, {transform_indices = @transform_5, window_bounds = array<i64: 256, 16>}]} {
    %c0 = arith.constant 0 : index
    %c0_0 = arith.constant 0 : index
    %0 = vector.load %arg1[%c0, %c0_0] : memref<256x32xf32, #tpu.memory_space<vmem>>, vector<256x32xf32>
    %c0_1 = arith.constant 0 : index
    %c0_2 = arith.constant 0 : index
    %1 = vector.load %arg2[%c0_1, %c0_2] : memref<32x32xf32, #tpu.memory_space<vmem>>, vector<32x32xf32>
    %cst = arith.constant dense<0.000000e+00> : vector<256x32xf32>
    %2 = tpu.matmul %0, %1, %cst {dimension_numbers = #tpu.dot_dimension_numbers<[1], [0], [0], [1], [0, 0, 1, 1], [], []>} : vector<256x32xf32>, vector<32x32xf32>, vector<256x32xf32> -> vector<256x32xf32>
    %c0_3 = arith.constant 0 : index
    %c0_4 = arith.constant 0 : index
    %3 = vector.load %arg3[%c0_3, %c0_4] : memref<1x32xf32, #tpu.memory_space<vmem>>, vector<1x32xf32>
    %4 = vector.broadcast %3 : vector<1x32xf32> to vector<256x32xf32>
    %5 = arith.addf %2, %4 : vector<256x32xf32>
    %6 = math.tanh %5 : vector<256x32xf32>
    %c0_5 = arith.constant 0 : index
    %c0_6 = arith.constant 0 : index
    %7 = vector.load %arg4[%c0_5, %c0_6] : memref<32x16xf32, #tpu.memory_space<vmem>>, vector<32x16xf32>
    %cst_7 = arith.constant dense<0.000000e+00> : vector<256x16xf32>
    %8 = tpu.matmul %6, %7, %cst_7 {dimension_numbers = #tpu.dot_dimension_numbers<[1], [0], [0], [1], [0, 0, 1, 1], [], []>} : vector<256x32xf32>, vector<32x16xf32>, vector<256x16xf32> -> vector<256x16xf32>
    %c0_8 = arith.constant 0 : index
    %c0_9 = arith.constant 0 : index
    %9 = vector.load %arg5[%c0_8, %c0_9] : memref<1x16xf32, #tpu.memory_space<vmem>>, vector<1x16xf32>
    %10 = vector.broadcast %9 : vector<1x16xf32> to vector<256x16xf32>
    %11 = arith.addf %8, %10 : vector<256x16xf32>
    %c0_10 = arith.constant 0 : index
    %c0_11 = arith.constant 0 : index
    %12 = vector.load %arg6[%c0_10, %c0_11] : memref<256x16xf32, #tpu.memory_space<vmem>>, vector<256x16xf32>
    tpu.vector_store %arg6[%c0_10, %c0_11], %11 {strides = array<i32>} : memref<256x16xf32, #tpu.memory_space<vmem>>, vector<256x16xf32>,
    return
  }
  func.func @transform_0(%arg0: i32) -> (i32, i32) {
    %c0_i32 = arith.constant 0 : i32
    %c0_i32_0 = arith.constant 0 : i32
    return %arg0, %c0_i32 : i32, i32
  }
  func.func @transform_1(%arg0: i32) -> (i32, i32) {
    %c0_i32 = arith.constant 0 : i32
    %c0_i32_0 = arith.constant 0 : i32
    %c0_i32_1 = arith.constant 0 : i32
    return %c0_i32, %c0_i32_0 : i32, i32
  }
  func.func @transform_2(%arg0: i32) -> (i32, i32) {
    %c0_i32 = arith.constant 0 : i32
    %c0_i32_0 = arith.constant 0 : i32
    %c0_i32_1 = arith.constant 0 : i32
    return %c0_i32, %c0_i32_0 : i32, i32
  }
  func.func @transform_3(%arg0: i32) -> (i32, i32) {
    %c0_i32 = arith.constant 0 : i32
    %c0_i32_0 = arith.constant 0 : i32
    %c0_i32_1 = arith.constant 0 : i32
    return %c0_i32, %c0_i32_0 : i32, i32
  }
  func.func @transform_4(%arg0: i32) -> (i32, i32) {
    %c0_i32 = arith.constant 0 : i32
    %c0_i32_0 = arith.constant 0 : i32
    %c0_i32_1 = arith.constant 0 : i32
    return %c0_i32, %c0_i32_0 : i32, i32
  }
  func.func @transform_5(%arg0: i32) -> (i32, i32) {
    %c0_i32 = arith.constant 0 : i32
    %c0_i32_0 = arith.constant 0 : i32
    return %arg0, %c0_i32 : i32, i32
  }
}

</mosaic_0001>

<llo_original>
// kernel: _nn3l_pallas.1
$region0: #{_nn3l_pallas.1}
  #allocation0 [shape = 'u32[]', space=smem, size = 0x4, offset = 0x4, fixed_abs, tag = 'smem constant byte address 0x4 - core index']
  #allocation1 [shape = 'u32[72,128]{1,0:T(1,128)}', space=vmem, size = 0x9000, scoped, tag = 'internal scratch']
  %s0 = inlined_call_operand.vmem [shape: f32[512,32], index: 0, kind: input, shape index: {}]
  %s1 = inlined_call_operand.vmem [shape: f32[32,32], index: 1, kind: input, shape index: {}]
  %s2 = inlined_call_operand.vmem [shape: f32[1,32], index: 2, kind: input, shape index: {}]
  %s3 = inlined_call_operand.vmem [shape: f32[32,16], index: 3, kind: input, shape index: {}]
  %s4 = inlined_call_operand.vmem [shape: f32[1,16], index: 4, kind: input, shape index: {}]
  %s5 = inlined_call_operand.vmem [shape: f32[512,16], index: 5, kind: output, shape index: {}]
  %s6 = sld [smem:[#allocation0]]
  $region53: #{_nn3l_pallas.1} parent=0
    _
  %s8 = ssub.s32 1, %s6
  %s9 = scalar_select 0, %s8, %s6
  loop: start=0, step=1, limit=4
  $region2: #{_nn3l_pallas.1} parent=0 // loop_pre_header
    _
  $region3: #{_nn3l_pallas.1} parent=0 // loop_header
    %s11 = sphi 0, %s15
    %p12 = scmp.ge.s32.totalorder %s11, 4
    %s21 = sphi 0, %s23
    %s24 = sphi 0, %s21
    %s25 = sphi 0, %s24
    %s41 = sphi 0, %s25
    %s45 = sphi 0, %s45
    %s47 = sphi 0, %s45
    %s48 = sphi 0, %s47
    %s62 = sphi 0, %s48
    %s66 = sphi 0, %s66
    %s68 = sphi 0, %s66
    %s69 = sphi 0, %s68
    %s83 = sphi 0, %s69
    %s87 = sphi 0, %s87
    %s89 = sphi 0, %s87
    %s90 = sphi 0, %s89
    %s104 = sphi 0, %s90
    %s108 = sphi 0, %s108
    %s110 = sphi 0, %s108
    %s111 = sphi 0, %s110
    %s125 = sphi 0, %s111
    %s131 = sphi 0, %s133
    %s134 = sphi 0, %s131
    %s135 = sphi 0, %s134
    %s151 = sphi 0, %s135
  $region4: #{_nn3l_pallas.1} parent=0 // loop_header_branch
    %14 = sbr.rel (%p12) target = $region8
  $region5: #{_nn3l_pallas.1} parent=0 // loop_body
    %s16 = ssub.s32 %s11, 1
    %s17 = ssub.s32 %s11, 2
    %s18 = sadd.s32 %s11, 1
    %s19 = ssub.s32 %s11, %s18
    %p20 = scmp.eq.s32.totalorder %s19, 0
    %s22 = sadd.s32 %s21, 1
    %s23 = scalar_select %p20, %s21, %s22
    %p26 = pneg %p20
    %p27 = scmp.eq.s32.totalorder %s11, 1
    %p28 = por %p26, %p27
    %p29 = scmp.ne.s32.totalorder %s21, %s24
    %p30 = scmp.eq.s32.totalorder %s11, 0
    %p31 = por %p29, %p30
    %p32 = scmp.ne.s32.totalorder %s21, %s24
    %p33 = scmp.eq.s32.totalorder %s16, 1
    %p34 = por %p32, %p33
    %p35 = scmp.ne.s32.totalorder %s24, %s25
    %p36 = scmp.eq.s32.totalorder %s16, 0
    %p37 = por %p35, %p36
    %p38 = scmp.ne.s32.totalorder %s24, %s25
    %p39 = scmp.eq.s32.totalorder %s17, 1
    %p40 = por %p38, %p39
    %p42 = scmp.ne.s32.totalorder %s25, %s41
    %p43 = scmp.eq.s32.totalorder %s17, 0
    %p44 = por %p42, %p43
    %s46 = sadd.s32 %s45, 1
    %p49 = scmp.eq.s32.totalorder %s11, 1
    %p50 = scmp.ne.s32.totalorder %s45, %s47
    %p51 = scmp.eq.s32.totalorder %s11, 0
    %p52 = por %p50, %p51
    %p53 = scmp.ne.s32.totalorder %s45, %s47
    %p54 = scmp.eq.s32.totalorder %s16, 1
    %p55 = por %p53, %p54
    %p56 = scmp.ne.s32.totalorder %s47, %s48
    %p57 = scmp.eq.s32.totalorder %s16, 0
    %p58 = por %p56, %p57
    %p59 = scmp.ne.s32.totalorder %s47, %s48
    %p60 = scmp.eq.s32.totalorder %s17, 1
    %p61 = por %p59, %p60
    %p63 = scmp.ne.s32.totalorder %s48, %s62
    %p64 = scmp.eq.s32.totalorder %s17, 0
    %p65 = por %p63, %p64
    %s67 = sadd.s32 %s66, 1
    %p70 = scmp.eq.s32.totalorder %s11, 1
    %p71 = scmp.ne.s32.totalorder %s66, %s68
    %p72 = scmp.eq.s32.totalorder %s11, 0
    %p73 = por %p71, %p72
    %p74 = scmp.ne.s32.totalorder %s66, %s68
    %p75 = scmp.eq.s32.totalorder %s16, 1
    %p76 = por %p74, %p75
    %p77 = scmp.ne.s32.totalorder %s68, %s69
    %p78 = scmp.eq.s32.totalorder %s16, 0
    %p79 = por %p77, %p78
    %p80 = scmp.ne.s32.totalorder %s68, %s69
    %p81 = scmp.eq.s32.totalorder %s17, 1
    %p82 = por %p80, %p81
    %p84 = scmp.ne.s32.totalorder %s69, %s83
    %p85 = scmp.eq.s32.totalorder %s17, 0
    %p86 = por %p84, %p85
    %s88 = sadd.s32 %s87, 1
    %p91 = scmp.eq.s32.totalorder %s11, 1
    %p92 = scmp.ne.s32.totalorder %s87, %s89
    %p93 = scmp.eq.s32.totalorder %s11, 0
    %p94 = por %p92, %p93
    %p95 = scmp.ne.s32.totalorder %s87, %s89
    %p96 = scmp.eq.s32.totalorder %s16, 1
    %p97 = por %p95, %p96
    %p98 = scmp.ne.s32.totalorder %s89, %s90
    %p99 = scmp.eq.s32.totalorder %s16, 0
    %p100 = por %p98, %p99
    %p101 = scmp.ne.s32.totalorder %s89, %s90
    %p102 = scmp.eq.s32.totalorder %s17, 1
    %p103 = por %p101, %p102
    %p105 = scmp.ne.s32.totalorder %s90, %s104
    %p106 = scmp.eq.s32.totalorder %s17, 0
    %p107 = por %p105, %p106
    %s109 = sadd.s32 %s108, 1
    %p112 = scmp.eq.s32.totalorder %s11, 1
    %p113 = scmp.ne.s32.totalorder %s108, %s110
    %p114 = scmp.eq.s32.totalorder %s11, 0
    %p115 = por %p113, %p114
    %p116 = scmp.ne.s32.totalorder %s108, %s110
    %p117 = scmp.eq.s32.totalorder %s16, 1
    %p118 = por %p116, %p117
    %p119 = scmp.ne.s32.totalorder %s110, %s111
    %p120 = scmp.eq.s32.totalorder %s16, 0
    %p121 = por %p119, %p120
    %p122 = scmp.ne.s32.totalorder %s110, %s111
    %p123 = scmp.eq.s32.totalorder %s17, 1
    %p124 = por %p122, %p123
    %p126 = scmp.ne.s32.totalorder %s111, %s125
    %p127 = scmp.eq.s32.totalorder %s17, 0
    %p128 = por %p126, %p127
    %s129 = ssub.s32 %s11, %s18
    %p130 = scmp.eq.s32.totalorder %s129, 0
    %s132 = sadd.s32 %s131, 1
    %s133 = scalar_select %p130, %s131, %s132
    %p136 = pneg %p130
    %p137 = scmp.eq.s32.totalorder %s11, 1
    %p138 = por %p136, %p137
    %p139 = scmp.ne.s32.totalorder %s131, %s134
    %p140 = scmp.eq.s32.totalorder %s11, 0
    %p141 = por %p139, %p140
    %p142 = scmp.ne.s32.totalorder %s131, %s134
    %p143 = scmp.eq.s32.totalorder %s16, 1
    %p144 = por %p142, %p143
    %p145 = scmp.ne.s32.totalorder %s134, %s135
    %p146 = scmp.eq.s32.totalorder %s16, 0
    %p147 = por %p145, %p146
    %p148 = scmp.ne.s32.totalorder %s134, %s135
    %p149 = scmp.eq.s32.totalorder %s17, 1
    %p150 = por %p148, %p149
    %p152 = scmp.ne.s32.totalorder %s135, %s151
    %p153 = scmp.eq.s32.totalorder %s17, 0
    %p154 = por %p152, %p153
    %p155 = scmp.le.s32.totalorder 1, %s11
    %p156 = scmp.lt.s32.totalorder %s11, 3
    %p157 = pnand %p155, %p156
    %p158 = pneg %p157
    // Predicated region
    $region9: #{_nn3l_pallas.1} parent=5 // pred_check
      _
    $region10: #{_nn3l_pallas.1} parent=5 // pred_check_branch
      %160 = sbr.rel (%p157) target = $region12
    $region11: #{_nn3l_pallas.1} parent=5 // pred_region
      %s161 = ssub.s32 %s11, 1
      // Predicated region
      $region13: #{_nn3l_pallas.1} parent=11 // pred_check
        %p162 = pneg %p58
      $region14: #{_nn3l_pallas.1} parent=11 // pred_check_branch
        %164 = sbr.rel (%p162) target = $region16
      $region15: #{_nn3l_pallas.1} parent=11 // pred_region
        _
      $region16: #{_nn3l_pallas.1} parent=11 // pred_fallthru
        _
      // Predicated region
      $region17: #{_nn3l_pallas.1} parent=11 // pred_check
        %p165 = pneg %p79
      $region18: #{_nn3l_pallas.1} parent=11 // pred_check_branch
        %167 = sbr.rel (%p165) target = $region20
      $region19: #{_nn3l_pallas.1} parent=11 // pred_region
        _
      $region20: #{_nn3l_pallas.1} parent=11 // pred_fallthru
        _
      // Predicated region
      $region21: #{_nn3l_pallas.1} parent=11 // pred_check
        %p168 = pneg %p100
      $region22: #{_nn3l_pallas.1} parent=11 // pred_check_branch
        %170 = sbr.rel (%p168) target = $region24
      $region23: #{_nn3l_pallas.1} parent=11 // pred_region
        _
      $region24: #{_nn3l_pallas.1} parent=11 // pred_fallthru
        _
      // Predicated region
      $region25: #{_nn3l_pallas.1} parent=11 // pred_check
        %p171 = pneg %p121
      $region26: #{_nn3l_pallas.1} parent=11 // pred_check_branch
        %173 = sbr.rel (%p171) target = $region28
      $region27: #{_nn3l_pallas.1} parent=11 // pred_region
        _
      $region28: #{_nn3l_pallas.1} parent=11 // pred_fallthru
        _
    $region12: #{_nn3l_pallas.1} parent=5 // pred_fallthru
      _
    %p174 = scmp.lt.s32.totalorder %s11, 2
    // Predicated region
    $region29: #{_nn3l_pallas.1} parent=5 // pred_check
      %p175 = pneg %p174
    $region30: #{_nn3l_pallas.1} parent=5 // pred_check_branch
      %177 = sbr.rel (%p175) target = $region32
    $region31: #{_nn3l_pallas.1} parent=5 // pred_region
      // Predicated region
      $region33: #{_nn3l_pallas.1} parent=31 // pred_check
        %p178 = pneg %p31
      $region34: #{_nn3l_pallas.1} parent=31 // pred_check_branch
        %180 = sbr.rel (%p178) target = $region36
      $region35: #{_nn3l_pallas.1} parent=31 // pred_region
        %s181 = smul.u32 32, %s11
        %p182 = scmp.lt.s32.totalorder %s181, 63
        %s183 = scalar_select %p182, %s181, 63
        %s184 = smul.addr %s183, 8
        %s185 = scalar_lea.vmem %s0, %s184
        %s186 = smul.u32 32, %s11
      $region36: #{_nn3l_pallas.1} parent=31 // pred_fallthru
        _
    $region32: #{_nn3l_pallas.1} parent=5 // pred_fallthru
      _
    %p187 = scmp.le.s32.totalorder 1, %s11
    %p188 = scmp.lt.s32.totalorder %s11, 3
    %p189 = pnand %p187, %p188
    %p190 = pneg %p189
    // Predicated region
    $region37: #{_nn3l_pallas.1} parent=5 // pred_check
      _
    $region38: #{_nn3l_pallas.1} parent=5 // pred_check_branch
      %192 = sbr.rel (%p189) target = $region40
    $region39: #{_nn3l_pallas.1} parent=5 // pred_region
      %s193 = ssub.s32 %s11, 1
      %s194 = smul.u32 32, %s16
      %p195 = scmp.lt.s32.totalorder %s194, 63
      %s196 = scalar_select %p195, %s194, 63
      %s197 = smul.addr %s196, 8
      %s198 = scalar_lea.vmem %s0, %s197
      %p199 = pneg %p37
      %p200 = pneg %p34
      %p201 = pneg %p58
      %p202 = pneg %p55
      %p203 = pneg %p79
      %p204 = pneg %p76
      %p205 = pneg %p100
      %p206 = pneg %p97
      %p207 = pneg %p121
      %p208 = pneg %p118
      %p209 = pneg %p147
      %p210 = pneg %p144
      %s211 = smul.u32 32, %s16
      %p212 = scmp.lt.s32.totalorder %s211, 63
      %s213 = scalar_select %p212, %s211, 63
      %s214 = smul.addr %s213, 8
      %s215 = scalar_lea.vmem %s5, %s214
      %s216 = smul.u32 32, %s16
      %p217 = scmp.lt.s32.totalorder %s216, 63
      %s218 = scalar_select %p217, %s216, 63
      %s219 = smul.addr %s218, 8
      %s220 = scalar_lea.vmem %s0, %s219
      %s221 = smul.u32 32, %s16
      %s222 = smul.u32 32, %s16
      %p223 = scmp.lt.s32.totalorder %s222, 63
      %s224 = scalar_select %p223, %s222, 63
      %s225 = smul.addr %s224, 8
      %s226 = scalar_lea.vmem %s5, %s225
      %s227 = smul.u32 32, %s16
      %v228 = vld [vmem:[%s220] sm:$0xff]
      %v229 = vld [vmem:[%s220 + $0x8] sm:$0xff]
      %v230 = vld [vmem:[%s220 + $0x10] sm:$0xff]
      %v231 = vld [vmem:[%s220 + $0x18] sm:$0xff]
      %v232 = vld [vmem:[%s220 + $0x20] sm:$0xff]
      %v233 = vld [vmem:[%s220 + $0x28] sm:$0xff]
      %v234 = vld [vmem:[%s220 + $0x30] sm:$0xff]
      %v235 = vld [vmem:[%s220 + $0x38] sm:$0xff]
      %v236 = vld [vmem:[%s220 + $0x40] sm:$0xff]
      %v237 = vld [vmem:[%s220 + $0x48] sm:$0xff]
      %v238 = vld [vmem:[%s220 + $0x50] sm:$0xff]
      %v239 = vld [vmem:[%s220 + $0x58] sm:$0xff]
      %v240 = vld [vmem:[%s220 + $0x60] sm:$0xff]
      %v241 = vld [vmem:[%s220 + $0x68] sm:$0xff]
      %v242 = vld [vmem:[%s220 + $0x70] sm:$0xff]
      %v243 = vld [vmem:[%s220 + $0x78] sm:$0xff]
      %v244 = vld [vmem:[%s220 + $0x80] sm:$0xff]
      %v245 = vld [vmem:[%s220 + $0x88] sm:$0xff]
      %v246 = vld [vmem:[%s220 + $0x90] sm:$0xff]
      %v247 = vld [vmem:[%s220 + $0x98] sm:$0xff]
      %v248 = vld [vmem:[%s220 + $0xa0] sm:$0xff]
      %v249 = vld [vmem:[%s220 + $0xa8] sm:$0xff]
      %v250 = vld [vmem:[%s220 + $0xb0] sm:$0xff]
      %v251 = vld [vmem:[%s220 + $0xb8] sm:$0xff]
      %v252 = vld [vmem:[%s220 + $0xc0] sm:$0xff]
      %v253 = vld [vmem:[%s220 + $0xc8] sm:$0xff]
      %v254 = vld [vmem:[%s220 + $0xd0] sm:$0xff]
      %v255 = vld [vmem:[%s220 + $0xd8] sm:$0xff]
      %v256 = vld [vmem:[%s220 + $0xe0] sm:$0xff]
      %v257 = vld [vmem:[%s220 + $0xe8] sm:$0xff]
      %v258 = vld [vmem:[%s220 + $0xf0] sm:$0xff]
      %v259 = vld [vmem:[%s220 + $0xf8] sm:$0xff]
      %v260 = vld [vmem:[%s1] sm:$0xff]
      %v261 = vld [vmem:[%s1 + $0x8] sm:$0xff]
      %v262 = vld [vmem:[%s1 + $0x10] sm:$0xff]
      %v263 = vld [vmem:[%s1 + $0x18] sm:$0xff]
      %v264 = vld [vmem:[%s2] sm:$0x1]
      %v266 = vperm.slane %v264, 0
      %vm268 = vcmask 261120
      %v270 = vsel %vm268, %v228, 0
      %v273 = vsel %vm268, %v229, 0
      %v276 = vsel %vm268, %v230, 0
      %v279 = vsel %vm268, %v231, 0
      %v282 = vsel %vm268, %v232, 0
      %v285 = vsel %vm268, %v233, 0
      %v288 = vsel %vm268, %v234, 0
      %v291 = vsel %vm268, %v235, 0
      %v294 = vsel %vm268, %v236, 0
      %v297 = vsel %vm268, %v237, 0
      %v300 = vsel %vm268, %v238, 0
      %v303 = vsel %vm268, %v239, 0
      %v306 = vsel %vm268, %v240, 0
      %v309 = vsel %vm268, %v241, 0
      %v312 = vsel %vm268, %v242, 0
      %v315 = vsel %vm268, %v243, 0
      %v318 = vsel %vm268, %v244, 0
      %v321 = vsel %vm268, %v245, 0
      %v324 = vsel %vm268, %v246, 0
      %v327 = vsel %vm268, %v247, 0
      %v330 = vsel %vm268, %v248, 0
      %v333 = vsel %vm268, %v249, 0
      %v336 = vsel %vm268, %v250, 0
      %v339 = vsel %vm268, %v251, 0
      %v342 = vsel %vm268, %v252, 0
      %v345 = vsel %vm268, %v253, 0
      %v348 = vsel %vm268, %v254, 0
      %v351 = vsel %vm268, %v255, 0
      %v354 = vsel %vm268, %v256, 0
      %v357 = vsel %vm268, %v257, 0
      %v360 = vsel %vm268, %v258, 0
      %v363 = vsel %vm268, %v259, 0
      %365 = vmatpush.msra.mxu0 0.0
      %366 = vmatpush.msra.mxu0 0.0
      %367 = vmatpush.msra.mxu0 0.0
      %368 = vmatpush.msra.mxu0 0.0
      %369 = vmatpush.msra.mxu0 0.0
      %370 = vmatpush.msra.mxu0 0.0
      %371 = vmatpush.msra.mxu0 0.0
      %372 = vmatpush.msra.mxu0 0.0
      %373 = vmatpush.msra.mxu0 0.0
      %374 = vmatpush.msra.mxu0 0.0
      %375 = vmatpush.msra.mxu0 0.0
      %376 = vmatpush.msra.mxu0 0.0
      %377 = vmatpush.msra.mxu0 %v263
      %378 = vmatpush.msra.mxu0 %v262
      %379 = vmatpush.msra.mxu0 %v261
      %380 = vmatpush.msra.mxu0 %v260
      %381 = vmatmul.f32.gmra.mxu0 %v270
      %v382 = vpop.f32.mrf.mxu0
      %v383 = vadd.f32 %v266, %v382
      %384 = vmatmul.f32.gmra.mxu0 %v273
      %v385 = vpop.f32.mrf.mxu0
      %v386 = vadd.f32 %v266, %v385
      %387 = vmatmul.f32.gmra.mxu0 %v276
      %v388 = vpop.f32.mrf.mxu0
      %v389 = vadd.f32 %v266, %v388
      %390 = vmatmul.f32.gmra.mxu0 %v279
      %v391 = vpop.f32.mrf.mxu0
      %v392 = vadd.f32 %v266, %v391
      %393 = vmatmul.f32.gmra.mxu0 %v282
      %v394 = vpop.f32.mrf.mxu0
      %v395 = vadd.f32 %v266, %v394
      %396 = vmatmul.f32.gmra.mxu0 %v285
      %v397 = vpop.f32.mrf.mxu0
      %v398 = vadd.f32 %v266, %v397
      %399 = vmatmul.f32.gmra.mxu0 %v288
      %v400 = vpop.f32.mrf.mxu0
      %v401 = vadd.f32 %v266, %v400
      %402 = vmatmul.f32.gmra.mxu0 %v291
      %v403 = vpop.f32.mrf.mxu0
      %v404 = vadd.f32 %v266, %v403
      %405 = vmatmul.f32.gmra.mxu0 %v294
      %v406 = vpop.f32.mrf.mxu0
      %v407 = vadd.f32 %v266, %v406
      %408 = vmatmul.f32.gmra.mxu0 %v297
      %v409 = vpop.f32.mrf.mxu0
      %v410 = vadd.f32 %v266, %v409
      %411 = vmatmul.f32.gmra.mxu0 %v300
      %v412 = vpop.f32.mrf.mxu0
      %v413 = vadd.f32 %v266, %v412
      %414 = vmatmul.f32.gmra.mxu0 %v303
      %v415 = vpop.f32.mrf.mxu0
      %v416 = vadd.f32 %v266, %v415
      %417 = vmatmul.f32.gmra.mxu0 %v306
      %v418 = vpop.f32.mrf.mxu0
      %v419 = vadd.f32 %v266, %v418
      %420 = vmatmul.f32.gmra.mxu0 %v309
      %v421 = vpop.f32.mrf.mxu0
      %v422 = vadd.f32 %v266, %v421
      %423 = vmatmul.f32.gmra.mxu0 %v312
      %v424 = vpop.f32.mrf.mxu0
      %v425 = vadd.f32 %v266, %v424
      %426 = vmatmul.f32.gmra.mxu0 %v315
      %v427 = vpop.f32.mrf.mxu0
      %v428 = vadd.f32 %v266, %v427
      %429 = vmatmul.f32.gmra.mxu0 %v318
      %v430 = vpop.f32.mrf.mxu0
      %v431 = vadd.f32 %v266, %v430
      %432 = vmatmul.f32.gmra.mxu0 %v321
      %v433 = vpop.f32.mrf.mxu0
      %v434 = vadd.f32 %v266, %v433
      %435 = vmatmul.f32.gmra.mxu0 %v324
      %v436 = vpop.f32.mrf.mxu0
      %v437 = vadd.f32 %v266, %v436
      %438 = vmatmul.f32.gmra.mxu0 %v327
      %v439 = vpop.f32.mrf.mxu0
      %v440 = vadd.f32 %v266, %v439
      %441 = vmatmul.f32.gmra.mxu0 %v330
      %v442 = vpop.f32.mrf.mxu0
      %v443 = vadd.f32 %v266, %v442
      %444 = vmatmul.f32.gmra.mxu0 %v333
      %v445 = vpop.f32.mrf.mxu0
      %v446 = vadd.f32 %v266, %v445
      %447 = vmatmul.f32.gmra.mxu0 %v336
      %v448 = vpop.f32.mrf.mxu0
      %v449 = vadd.f32 %v266, %v448
      %450 = vmatmul.f32.gmra.mxu0 %v339
      %v451 = vpop.f32.mrf.mxu0
      %v452 = vadd.f32 %v266, %v451
      %453 = vmatmul.f32.gmra.mxu0 %v342
      %v454 = vpop.f32.mrf.mxu0
      %v455 = vadd.f32 %v266, %v454
      %456 = vmatmul.f32.gmra.mxu0 %v345
      %v457 = vpop.f32.mrf.mxu0
      %v458 = vadd.f32 %v266, %v457
      %459 = vmatmul.f32.gmra.mxu0 %v348
      %v460 = vpop.f32.mrf.mxu0
      %v461 = vadd.f32 %v266, %v460
      %462 = vmatmul.f32.gmra.mxu0 %v351
      %v463 = vpop.f32.mrf.mxu0
      %v464 = vadd.f32 %v266, %v463
      %465 = vmatmul.f32.gmra.mxu0 %v354
      %v466 = vpop.f32.mrf.mxu0
      %v467 = vadd.f32 %v266, %v466
      %468 = vmatmul.f32.gmra.mxu0 %v357
      %v469 = vpop.f32.mrf.mxu0
      %v470 = vadd.f32 %v266, %v469
      %471 = vmatmul.f32.gmra.mxu0 %v360
      %v472 = vpop.f32.mrf.mxu0
      %v473 = vadd.f32 %v266, %v472
      %474 = vmatmul.f32.gmra.mxu0 %v363
      %v475 = vpop.f32.mrf.mxu0
      %v476 = vadd.f32 %v266, %v475
      %477 = vdwg.mxu0
      %v478 = vtanh.pop %v383
      %v479 = vtanh.pop %v386
      %v480 = vtanh.pop %v389
      %v481 = vtanh.pop %v392
      %v482 = vtanh.pop %v395
      %v483 = vtanh.pop %v398
      %v484 = vtanh.pop %v401
      %v485 = vtanh.pop %v404
      %v486 = vtanh.pop %v407
      %v487 = vtanh.pop %v410
      %v488 = vtanh.pop %v413
      %v489 = vtanh.pop %v416
      %v490 = vtanh.pop %v419
      %v491 = vtanh.pop %v422
      %v492 = vtanh.pop %v425
      %v493 = vtanh.pop %v428
      %v494 = vtanh.pop %v431
      %v495 = vtanh.pop %v434
      %v496 = vtanh.pop %v437
      %v497 = vtanh.pop %v440
      %v498 = vtanh.pop %v443
      %v499 = vtanh.pop %v446
      %v500 = vtanh.pop %v449
      %v501 = vtanh.pop %v452
      %v502 = vtanh.pop %v455
      %v503 = vtanh.pop %v458
      %v504 = vtanh.pop %v461
      %v505 = vtanh.pop %v464
      %v506 = vtanh.pop %v467
      %v507 = vtanh.pop %v470
      %v508 = vtanh.pop %v473
      %v509 = vtanh.pop %v476
      %v510 = vld [vmem:[%s3] sm:$0xff]
      %v511 = vld [vmem:[%s3 + $0x8] sm:$0xff]
      %v512 = vld [vmem:[%s3 + $0x10] sm:$0xff]
      %v513 = vld [vmem:[%s3 + $0x18] sm:$0xff]
      %v514 = vld [vmem:[%s4] sm:$0x1]
      %v516 = vperm.slane %v514, 0
      %v519 = vsel %vm268, %v478, 0
      %v522 = vsel %vm268, %v479, 0
      %v525 = vsel %vm268, %v480, 0
      %v528 = vsel %vm268, %v481, 0
      %v531 = vsel %vm268, %v482, 0
      %v534 = vsel %vm268, %v483, 0
      %v537 = vsel %vm268, %v484, 0
      %v540 = vsel %vm268, %v485, 0
      %v543 = vsel %vm268, %v486, 0
      %v546 = vsel %vm268, %v487, 0
      %v549 = vsel %vm268, %v488, 0
      %v552 = vsel %vm268, %v489, 0
      %v555 = vsel %vm268, %v490, 0
      %v558 = vsel %vm268, %v491, 0
      %v561 = vsel %vm268, %v492, 0
      %v564 = vsel %vm268, %v493, 0
      %v567 = vsel %vm268, %v494, 0
      %v570 = vsel %vm268, %v495, 0
      %v573 = vsel %vm268, %v496, 0
      %v576 = vsel %vm268, %v497, 0
      %v579 = vsel %vm268, %v498, 0
      %v582 = vsel %vm268, %v499, 0
      %v585 = vsel %vm268, %v500, 0
      %v588 = vsel %vm268, %v501, 0
      %v591 = vsel %vm268, %v502, 0
      %v594 = vsel %vm268, %v503, 0
      %v597 = vsel %vm268, %v504, 0
      %v600 = vsel %vm268, %v505, 0
      %v603 = vsel %vm268, %v506, 0
      %v606 = vsel %vm268, %v507, 0
      %v609 = vsel %vm268, %v508, 0
      %v612 = vsel %vm268, %v509, 0
      %614 = vmatpush.msra.mxu0 0.0
      %615 = vmatpush.msra.mxu0 0.0
      %616 = vmatpush.msra.mxu0 0.0
      %617 = vmatpush.msra.mxu0 0.0
      %618 = vmatpush.msra.mxu0 0.0
      %619 = vmatpush.msra.mxu0 0.0
      %620 = vmatpush.msra.mxu0 0.0
      %621 = vmatpush.msra.mxu0 0.0
      %622 = vmatpush.msra.mxu0 0.0
      %623 = vmatpush.msra.mxu0 0.0
      %624 = vmatpush.msra.mxu0 0.0
      %625 = vmatpush.msra.mxu0 0.0
      %626 = vmatpush.msra.mxu0 %v513
      %627 = vmatpush.msra.mxu0 %v512
      %628 = vmatpush.msra.mxu0 %v511
      %629 = vmatpush.msra.mxu0 %v510
      %630 = vmatmul.f32.gmra.mxu0 %v519
      %v631 = vpop.f32.mrf.mxu0
      %v632 = vadd.f32 %v516, %v631
      %633 = vmatmul.f32.gmra.mxu0 %v522
      %v634 = vpop.f32.mrf.mxu0
      %v635 = vadd.f32 %v516, %v634
      %636 = vmatmul.f32.gmra.mxu0 %v525
      %v637 = vpop.f32.mrf.mxu0
      %v638 = vadd.f32 %v516, %v637
      %639 = vmatmul.f32.gmra.mxu0 %v528
      %v640 = vpop.f32.mrf.mxu0
      %v641 = vadd.f32 %v516, %v640
      %642 = vmatmul.f32.gmra.mxu0 %v531
      %v643 = vpop.f32.mrf.mxu0
      %v644 = vadd.f32 %v516, %v643
      %645 = vmatmul.f32.gmra.mxu0 %v534
      %v646 = vpop.f32.mrf.mxu0
      %v647 = vadd.f32 %v516, %v646
      %648 = vmatmul.f32.gmra.mxu0 %v537
      %v649 = vpop.f32.mrf.mxu0
      %v650 = vadd.f32 %v516, %v649
      %651 = vmatmul.f32.gmra.mxu0 %v540
      %v652 = vpop.f32.mrf.mxu0
      %v653 = vadd.f32 %v516, %v652
      %654 = vmatmul.f32.gmra.mxu0 %v543
      %v655 = vpop.f32.mrf.mxu0
      %v656 = vadd.f32 %v516, %v655
      %657 = vmatmul.f32.gmra.mxu0 %v546
      %v658 = vpop.f32.mrf.mxu0
      %v659 = vadd.f32 %v516, %v658
      %660 = vmatmul.f32.gmra.mxu0 %v549
      %v661 = vpop.f32.mrf.mxu0
      %v662 = vadd.f32 %v516, %v661
      %663 = vmatmul.f32.gmra.mxu0 %v552
      %v664 = vpop.f32.mrf.mxu0
      %v665 = vadd.f32 %v516, %v664
      %666 = vmatmul.f32.gmra.mxu0 %v555
      %v667 = vpop.f32.mrf.mxu0
      %v668 = vadd.f32 %v516, %v667
      %669 = vmatmul.f32.gmra.mxu0 %v558
      %v670 = vpop.f32.mrf.mxu0
      %v671 = vadd.f32 %v516, %v670
      %672 = vmatmul.f32.gmra.mxu0 %v561
      %v673 = vpop.f32.mrf.mxu0
      %v674 = vadd.f32 %v516, %v673
      %675 = vmatmul.f32.gmra.mxu0 %v564
      %v676 = vpop.f32.mrf.mxu0
      %v677 = vadd.f32 %v516, %v676
      %678 = vmatmul.f32.gmra.mxu0 %v567
      %v679 = vpop.f32.mrf.mxu0
      %v680 = vadd.f32 %v516, %v679
      %681 = vmatmul.f32.gmra.mxu0 %v570
      %v682 = vpop.f32.mrf.mxu0
      %v683 = vadd.f32 %v516, %v682
      %684 = vmatmul.f32.gmra.mxu0 %v573
      %v685 = vpop.f32.mrf.mxu0
      %v686 = vadd.f32 %v516, %v685
      %687 = vmatmul.f32.gmra.mxu0 %v576
      %v688 = vpop.f32.mrf.mxu0
      %v689 = vadd.f32 %v516, %v688
      %690 = vmatmul.f32.gmra.mxu0 %v579
      %v691 = vpop.f32.mrf.mxu0
      %v692 = vadd.f32 %v516, %v691
      %693 = vmatmul.f32.gmra.mxu0 %v582
      %v694 = vpop.f32.mrf.mxu0
      %v695 = vadd.f32 %v516, %v694
      %696 = vmatmul.f32.gmra.mxu0 %v585
      %v697 = vpop.f32.mrf.mxu0
      %v698 = vadd.f32 %v516, %v697
      %699 = vmatmul.f32.gmra.mxu0 %v588
      %v700 = vpop.f32.mrf.mxu0
      %v701 = vadd.f32 %v516, %v700
      %702 = vmatmul.f32.gmra.mxu0 %v591
      %v703 = vpop.f32.mrf.mxu0
      %v704 = vadd.f32 %v516, %v703
      %705 = vmatmul.f32.gmra.mxu0 %v594
      %v706 = vpop.f32.mrf.mxu0
      %v707 = vadd.f32 %v516, %v706
      %708 = vmatmul.f32.gmra.mxu0 %v597
      %v709 = vpop.f32.mrf.mxu0
      %v710 = vadd.f32 %v516, %v709
      %711 = vmatmul.f32.gmra.mxu0 %v600
      %v712 = vpop.f32.mrf.mxu0
      %v713 = vadd.f32 %v516, %v712
      %714 = vmatmul.f32.gmra.mxu0 %v603
      %v715 = vpop.f32.mrf.mxu0
      %v716 = vadd.f32 %v516, %v715
      %717 = vmatmul.f32.gmra.mxu0 %v606
      %v718 = vpop.f32.mrf.mxu0
      %v719 = vadd.f32 %v516, %v718
      %720 = vmatmul.f32.gmra.mxu0 %v609
      %v721 = vpop.f32.mrf.mxu0
      %v722 = vadd.f32 %v516, %v721
      %723 = vmatmul.f32.gmra.mxu0 %v612
      %v724 = vpop.f32.mrf.mxu0
      %v725 = vadd.f32 %v516, %v724
      %726 = vdwg.mxu0
      %vm727 = vcmask 130048
      %728 = vst.msk [vmem:[%s226] sm:$0xff] %vm727, %v632
      %729 = vst.msk [vmem:[%s226 + $0x8] sm:$0xff] %vm727, %v635
      %730 = vst.msk [vmem:[%s226 + $0x10] sm:$0xff] %vm727, %v638
      %731 = vst.msk [vmem:[%s226 + $0x18] sm:$0xff] %vm727, %v641
      %732 = vst.msk [vmem:[%s226 + $0x20] sm:$0xff] %vm727, %v644
      %733 = vst.msk [vmem:[%s226 + $0x28] sm:$0xff] %vm727, %v647
      %734 = vst.msk [vmem:[%s226 + $0x30] sm:$0xff] %vm727, %v650
      %735 = vst.msk [vmem:[%s226 + $0x38] sm:$0xff] %vm727, %v653
      %736 = vst.msk [vmem:[%s226 + $0x40] sm:$0xff] %vm727, %v656
      %737 = vst.msk [vmem:[%s226 + $0x48] sm:$0xff] %vm727, %v659
      %738 = vst.msk [vmem:[%s226 + $0x50] sm:$0xff] %vm727, %v662
      %739 = vst.msk [vmem:[%s226 + $0x58] sm:$0xff] %vm727, %v665
      %740 = vst.msk [vmem:[%s226 + $0x60] sm:$0xff] %vm727, %v668
      %741 = vst.msk [vmem:[%s226 + $0x68] sm:$0xff] %vm727, %v671
      %742 = vst.msk [vmem:[%s226 + $0x70] sm:$0xff] %vm727, %v674
      %743 = vst.msk [vmem:[%s226 + $0x78] sm:$0xff] %vm727, %v677
      %744 = vst.msk [vmem:[%s226 + $0x80] sm:$0xff] %vm727, %v680
      %745 = vst.msk [vmem:[%s226 + $0x88] sm:$0xff] %vm727, %v683
      %746 = vst.msk [vmem:[%s226 + $0x90] sm:$0xff] %vm727, %v686
      %747 = vst.msk [vmem:[%s226 + $0x98] sm:$0xff] %vm727, %v689
      %748 = vst.msk [vmem:[%s226 + $0xa0] sm:$0xff] %vm727, %v692
      %749 = vst.msk [vmem:[%s226 + $0xa8] sm:$0xff] %vm727, %v695
      %750 = vst.msk [vmem:[%s226 + $0xb0] sm:$0xff] %vm727, %v698
      %751 = vst.msk [vmem:[%s226 + $0xb8] sm:$0xff] %vm727, %v701
      %752 = vst.msk [vmem:[%s226 + $0xc0] sm:$0xff] %vm727, %v704
      %753 = vst.msk [vmem:[%s226 + $0xc8] sm:$0xff] %vm727, %v707
      %754 = vst.msk [vmem:[%s226 + $0xd0] sm:$0xff] %vm727, %v710
      %755 = vst.msk [vmem:[%s226 + $0xd8] sm:$0xff] %vm727, %v713
      %756 = vst.msk [vmem:[%s226 + $0xe0] sm:$0xff] %vm727, %v716
      %757 = vst.msk [vmem:[%s226 + $0xe8] sm:$0xff] %vm727, %v719
      %758 = vst.msk [vmem:[%s226 + $0xf0] sm:$0xff] %vm727, %v722
      %759 = vst.msk [vmem:[%s226 + $0xf8] sm:$0xff] %vm727, %v725
      %s760 = smul.u32 32, %s16
      %p761 = scmp.lt.s32.totalorder %s760, 63
      %s762 = scalar_select %p761, %s760, 63
      %s763 = smul.addr %s762, 8
      %s764 = scalar_lea.vmem %s5, %s763
      // Predicated region
      $region41: #{_nn3l_pallas.1} parent=39 // pred_check
        %p765 = pneg %p144
      $region42: #{_nn3l_pallas.1} parent=39 // pred_check_branch
        %767 = sbr.rel (%p765) target = $region44
      $region43: #{_nn3l_pallas.1} parent=39 // pred_region
        %s768 = smul.u32 32, %s16
      $region44: #{_nn3l_pallas.1} parent=39 // pred_fallthru
        _
    $region40: #{_nn3l_pallas.1} parent=5 // pred_fallthru
      _
    %p769 = scmp.le.s32.totalorder 2, %s11
    // Predicated region
    $region45: #{_nn3l_pallas.1} parent=5 // pred_check
      %p770 = pneg %p769
    $region46: #{_nn3l_pallas.1} parent=5 // pred_check_branch
      %772 = sbr.rel (%p770) target = $region48
    $region47: #{_nn3l_pallas.1} parent=5 // pred_region
      %s773 = ssub.s32 %s11, 2
      // Predicated region
      $region49: #{_nn3l_pallas.1} parent=47 // pred_check
        %p774 = pneg %p150
      $region50: #{_nn3l_pallas.1} parent=47 // pred_check_branch
        %776 = sbr.rel (%p774) target = $region52
      $region51: #{_nn3l_pallas.1} parent=47 // pred_region
        %s777 = smul.u32 32, %s17
        %p778 = scmp.lt.s32.totalorder %s777, 63
        %s779 = scalar_select %p778, %s777, 63
        %s780 = smul.addr %s779, 8
        %s781 = scalar_lea.vmem %s5, %s780
      $region52: #{_nn3l_pallas.1} parent=47 // pred_fallthru
        _
    $region48: #{_nn3l_pallas.1} parent=5 // pred_fallthru
      _
  $region6: #{_nn3l_pallas.1} parent=0 // loop_footer
    %s15 = sadd.s32 1, %s11
  $region7: #{_nn3l_pallas.1} parent=0 // loop_footer_branch
    %10 = sbr.rel target = $region3
  $region8: #{_nn3l_pallas.1} parent=0 // loop_exit
    _

</llo_original>
